<compile_context>
chip_gen: v7x
topology: tpu7x:2x2x1
jax: 0.10.0
libtpu: 0.0.40
codegen_flags: <defaults>
</compile_context>

<pallas_src>
import functools

import jax
import jax.numpy as jnp
from jax import lax
from jax.experimental import pallas as pl
from jax.experimental.pallas import tpu as pltpu


_MAX_B_TILE = 16                      # cap on statically unrolled samples/step
_VMEM_BUDGET = 40 * 1024 * 1024       # per-step working-set target (v7x-safe)


def _round_up(x, m):
    return (x + m - 1) // m * m


def _diag_all_covas(qn_f32, cov, n_cov, c_pad):
    """diag_j[p] = sum_c (M_j @ qn)[c, p] * qn[c, p], for every j at once.

    `cov` is the (J*Cp, Cp) stack of covariances, so one MXU matmul covers
    all j; the reshape splits the row dim at a multiple of 8 sublanes
    (Cp % 8 == 0), which keeps it tile-aligned.
    """
    mq = jnp.dot(cov, qn_f32.astype(cov.dtype),
                 preferred_element_type=jnp.float32)        # (J*Cp, HWt) f32
    mq = mq.reshape(n_cov, c_pad, qn_f32.shape[-1])
    return jnp.sum(mq * qn_f32[None, :, :], axis=1)         # (J, HWt) f32


def _cova_kernel_fused(x_ref, cov_ref, o_ref, *, n_cov, c_pad, b_tile):
    # x_ref:   (Bt, Cp, HWp)    activations (f32 or bf16), full spatial extent
    # cov_ref: (J*Cp, Cp)       stacked covariances (constant across the grid)
    # o_ref:   (1, Bt, J, HWp)  similarity rows
    cov = cov_ref[...]
    for b in range(b_tile):           # Bt is small & static -> full unroll
        q = x_ref[b].astype(jnp.float32)                    # (Cp, HWp)
        ssq = jnp.sum(q * q, axis=1, keepdims=True)         # (Cp, 1)
        inv = jnp.where(ssq > 0.0, lax.rsqrt(ssq), 0.0)     # EUP rsqrt; 0-safe
        qn = q * inv
        o_ref[0, b] = _diag_all_covas(qn, cov, n_cov, c_pad)


def _cova_kernel_prenorm(x_ref, inv_ref, cov_ref, o_ref, *, n_cov, c_pad,
                         b_tile):
    # Spatially-tiled variant: per-(sample, channel) inverse norms are
    # precomputed in the wrapper so a tile never needs the full HW row.
    # x_ref: (Bt, Cp, HWt)   inv_ref: (Bt, Cp, 1)   o_ref: (1, Bt, J, HWt)
    cov = cov_ref[...]
    for b in range(b_tile):
        qn = x_ref[b].astype(jnp.float32) * inv_ref[b]      # (Cp, HWt) f32
        o_ref[0, b] = _diag_all_covas(qn, cov, n_cov, c_pad)


def _choose_tiles(B, Cp, HWp, J, in_item, b_tile, hw_tile, budget):
    """Pick (batch tile, spatial tile) and estimate the per-step VMEM need."""
    def est(bt_, hwt_):
        x_blk = bt_ * Cp * hwt_ * in_item
        out_blk = bt_ * _round_up(J, 8) * hwt_ * 4
        inv_blk = bt_ * Cp * 128 * 4
        cov_blk = _round_up(J * Cp, 8) * max(Cp, 128) * in_item
        # worst-case live temporaries (qn, mq, diag) per unrolled sample
        tmp = bt_ * (Cp + J * Cp + _round_up(J, 8)) * hwt_ * 4
        return 2 * (x_blk + out_blk + inv_blk + cov_blk) + tmp

    sample_bytes = max(1, Cp * HWp * in_item)
    if b_tile is not None:
        bt = max(1, min(int(b_tile), B))
    else:
        target = 2 * 1024 * 1024                  # aim for ~2 MiB x blocks
        bt = max(1, min(B, _MAX_B_TILE, -(-target // sample_bytes)))
        if bt >= B and B > 1 and B * sample_bytes >= 2 * target:
            bt = -(-B // 2)                       # keep >=2 steps for megacore
    hwt = HWp if hw_tile is None else max(128,
                                          _round_up(min(hw_tile, HWp), 128))
    while bt > 1 and est(bt, hwt) > budget:       # shrink batch tile first
        bt = max(1, bt // 2)
    while hwt > 128 and est(bt, hwt) > budget:    # then tile the spatial axis
        hwt = max(128, _round_up(hwt // 2, 128))
    nb = -(-B // bt)                              # rebalance -> minimal padding
    bt = -(-B // nb)
    return bt, hwt, est(bt, hwt)


def cova_m_loss(x_nchw, covas, *, use_bf16=False, b_tile=None, hw_tile=None):
    """x_nchw: (B, C, H, W); covas: (J, C, C)  ->  (B, 1, J*H*W) float32."""
    B, C, H, W = x_nchw.shape
    J = covas.shape[0]
    HW = H * W
    Cp = _round_up(C, 8)
    HWp = _round_up(HW, 128)
    in_dtype = jnp.bfloat16 if use_bf16 else jnp.float32
    in_item = jnp.dtype(in_dtype).itemsize

    bt, hwt, vmem_est = _choose_tiles(B, Cp, HWp, J, in_item, b_tile, hw_tile,
                                      _VMEM_BUDGET)
    HWp = _round_up(HWp, hwt)            # make the spatial tiling exact
    nh = HWp // hwt
    nb = -(-B // bt)
    B_pad = nb * bt
    prenorm = nh > 1                     # HW tiled -> norms precomputed

    x = x_nchw.reshape(B, C, HW).astype(jnp.float32)
    x = jnp.pad(x, ((0, B_pad - B), (0, Cp - C), (0, HWp - HW)))
    cov = jnp.pad(covas.astype(jnp.float32),
                  ((0, 0), (0, Cp - C), (0, Cp - C))).reshape(J * Cp, Cp)
    x_in = x.astype(in_dtype)
    cov_in = cov.astype(in_dtype)

    flops = B_pad * (2 * (J * Cp) * Cp * HWp    # stacked MXU matmul
                     + 3 * J * Cp * HWp         # diag multiply + reduce
                     + 3 * Cp * HWp)            # normalization
    bytes_accessed = (B_pad * Cp * HWp * in_item + J * Cp * Cp * in_item
                      + B_pad * J * HWp * 4)
    cost = pl.CostEstimate(flops=int(flops), transcendentals=int(B_pad * Cp),
                           bytes_accessed=int(bytes_accessed))
    # Explicit scoped-VMEM limit sized from the chosen tiles; clamped so it
    # stays inside v7x's 64 MiB physical VMEM.
    vmem_limit = int(min(max(vmem_est * 13 // 10, 32 * 1024 * 1024),
                         52 * 1024 * 1024))

    out_shape = jax.ShapeDtypeStruct((nb, bt, J, HWp), jnp.float32)

    if not prenorm:
        kernel = functools.partial(_cova_kernel_fused,
                                   n_cov=J, c_pad=Cp, b_tile=bt)
        grid = (nb,)
        in_specs = [
            pl.BlockSpec((bt, Cp, HWp), lambda b: (b, 0, 0)),
            # constant index_map -> fetched into VMEM once, resident across b
            pl.BlockSpec((J * Cp, Cp), lambda b: (0, 0)),
        ]
        out_specs = pl.BlockSpec((1, bt, J, HWp), lambda b: (b, 0, 0, 0))
        args = (x_in, cov_in)
        dims = ("parallel",)
    else:
        ssq = jnp.sum(x * x, axis=2, keepdims=True)          # (B_pad, Cp, 1)
        inv = jnp.where(ssq > 0.0, lax.rsqrt(ssq), 0.0)
        kernel = functools.partial(_cova_kernel_prenorm,
                                   n_cov=J, c_pad=Cp, b_tile=bt)
        grid = (nb, nh)
        in_specs = [
            pl.BlockSpec((bt, Cp, hwt), lambda b, h: (b, 0, h)),
            pl.BlockSpec((bt, Cp, 1), lambda b, h: (b, 0, 0)),
            pl.BlockSpec((J * Cp, Cp), lambda b, h: (0, 0)),
        ]
        out_specs = pl.BlockSpec((1, bt, J, hwt), lambda b, h: (b, 0, 0, h))
        args = (x_in, inv, cov_in)
        dims = ("parallel", "parallel")

    out = pl.pallas_call(
        kernel,
        out_shape=out_shape,
        grid=grid,
        in_specs=in_specs,
        out_specs=out_specs,
        compiler_params=pltpu.CompilerParams(
            dimension_semantics=dims, vmem_limit_bytes=vmem_limit),
        cost_estimate=cost,
    )(*args)

    # Drop batch/spatial padding and present the module's (B, 1, J*HW) layout.
    out = out.reshape(B_pad, J, HWp)[:B, :, :HW]
    return out.reshape(B, 1, J * HW)


def _reference(x_nchw, covas):
    # Pure-JAX mirror of CovaMLoss.cal_similarity for validation.
    B, C, H, W = x_nchw.shape
    q = x_nchw.reshape(B, C, H * W).astype(jnp.float32)
    qn = q / jnp.linalg.norm(q, axis=2, keepdims=True)
    mq = jnp.einsum("jcd,bdp->bjcp", covas.astype(jnp.float32), qn)
    diag = jnp.einsum("bjcp,bcp->bjp", mq, qn)
    return diag.reshape(B, 1, -1)


if __name__ == "__main__":
    key = jax.random.PRNGKey(0)
    kx, kc, kx2, kc2 = jax.random.split(key, 4)

    # Test 1: aligned shapes (batch=2, channels=8, 16x16 spatial, 3 covas).
    B, C, H, W, J = 2, 8, 16, 16, 3
    x = jax.random.normal(kx, (B, C, H, W), dtype=jnp.float32)
    raw = jax.random.normal(kc, (J, C, C), dtype=jnp.float32)
    covas = jnp.einsum("jck,jdk->jcd", raw, raw) / C          # symmetric PSD

    out = jax.block_until_ready(cova_m_loss(x, covas))
    ref = _reference(x, covas)
    assert out.shape == (B, 1, J * H * W), out.shape
    assert jnp.allclose(out, ref, rtol=1e-5, atol=1e-5), "mismatch (aligned)"

    # Test 2: ragged shapes exercise the channel/spatial padding (5->8, 121->128).
    B2, C2, H2, W2, J2 = 2, 5, 11, 11, 2
    x2 = jax.random.normal(kx2, (B2, C2, H2, W2), dtype=jnp.float32)
    raw2 = jax.random.normal(kc2, (J2, C2, C2), dtype=jnp.float32)
    covas2 = jnp.einsum("jck,jdk->jcd", raw2, raw2) / C2
    out2 = jax.block_until_ready(cova_m_loss(x2, covas2))
    ref2 = _reference(x2, covas2)
    assert out2.shape == (B2, 1, J2 * H2 * W2), out2.shape
    assert jnp.allclose(out2, ref2, rtol=1e-5, atol=1e-5), "mismatch (padded)"

    # Test 3: forced spatial tiling exercises the pre-normalized / 2-D-grid
    # path used when the per-step footprint would not fit v7x VMEM.
    out3 = jax.block_until_ready(cova_m_loss(x, covas, hw_tile=128, b_tile=1))
    assert jnp.allclose(out3, ref, rtol=1e-5, atol=1e-5), "mismatch (hw-tiled)"

    # Test 4: bf16 matmul operands (HBM-traffic optimization), looser tolerance.
    out4 = jax.block_until_ready(cova_m_loss(x, covas, use_bf16=True))
    assert jnp.allclose(out4, ref, rtol=5e-2, atol=1e-2), "mismatch (bf16)"

    print("KERNEL_OK")
</pallas_src>

<mosaic_0001>
module attributes {stable_mosaic.version = 11 : i64} {
  func.func @_cova_kernel_fused(%arg0: i32, %arg1: memref<2x8x256xf32, #tpu.memory_space<vmem>>, %arg2: memref<24x8xf32, #tpu.memory_space<vmem>>, %arg3: memref<1x2x3x256xf32, #tpu.memory_space<vmem>>) attributes {dimension_semantics = [#tpu.dimension_semantics<parallel>], iteration_bounds = array<i64: 1>, scalar_prefetch = 0 : i64, scratch_operands = 0 : i64, tpu.core_type = #tpu.core_type<tc>, window_params = [{transform_indices = @transform_0, window_bounds = array<i64: 2, 8, 256>}, {pipeline_mode = #tpu.pipeline_mode<synchronous>, transform_indices = @transform_1, window_bounds = array<i64: 24, 8>}, {transform_indices = @transform_2, window_bounds = array<i64: 1, 2, 3, 256>}]} {
    %c0 = arith.constant 0 : index
    %c0_0 = arith.constant 0 : index
    %0 = vector.load %arg2[%c0, %c0_0] : memref<24x8xf32, #tpu.memory_space<vmem>>, vector<24x8xf32>
    %c0_1 = arith.constant 0 : index
    %c0_2 = arith.constant 0 : index
    %c0_3 = arith.constant 0 : index
    %1 = vector.load %arg1[%c0_1, %c0_2, %c0_3] : memref<2x8x256xf32, #tpu.memory_space<vmem>>, vector<1x8x256xf32>
    %2 = vector.shape_cast %1 : vector<1x8x256xf32> to vector<8x256xf32>
    %3 = arith.mulf %2, %2 : vector<8x256xf32>
    %cst = arith.constant dense<0.000000e+00> : vector<8xf32>
    %4 = vector.multi_reduction <add>, %3, %cst [1] : vector<8x256xf32> to vector<8xf32>
    %5 = vector.shape_cast %4 : vector<8xf32> to vector<8x1xf32>
    %cst_4 = arith.constant 0.000000e+00 : f32
    %6 = vector.broadcast %cst_4 : f32 to vector<8x1xf32>
    %7 = arith.cmpf ogt, %5, %6 : vector<8x1xf32>
    %8 = math.rsqrt %5 : vector<8x1xf32>
    %cst_5 = arith.constant 0.000000e+00 : f32
    %9 = vector.broadcast %cst_5 : f32 to vector<8x1xf32>
    %10 = arith.select %7, %8, %9 : vector<8x1xi1>, vector<8x1xf32>
    %11 = vector.broadcast %10 : vector<8x1xf32> to vector<8x256xf32>
    %12 = arith.mulf %2, %11 : vector<8x256xf32>
    %cst_6 = arith.constant dense<0.000000e+00> : vector<24x256xf32>
    %13 = tpu.matmul %0, %12, %cst_6 {dimension_numbers = #tpu.dot_dimension_numbers<[1], [0], [0], [1], [0, 0, 1, 1], [], []>} : vector<24x8xf32>, vector<8x256xf32>, vector<24x256xf32> -> vector<24x256xf32>
    %14 = vector.shape_cast %13 : vector<24x256xf32> to vector<3x8x256xf32>
    %15 = vector.shape_cast %12 : vector<8x256xf32> to vector<1x8x256xf32>
    %16 = vector.broadcast %15 : vector<1x8x256xf32> to vector<3x8x256xf32>
    %17 = arith.mulf %14, %16 : vector<3x8x256xf32>
    %cst_7 = arith.constant dense<0.000000e+00> : vector<3x256xf32>
    %18 = vector.multi_reduction <add>, %17, %cst_7 [1] : vector<3x8x256xf32> to vector<3x256xf32>
    %c0_8 = arith.constant 0 : index
    %c0_9 = arith.constant 0 : index
    %c0_10 = arith.constant 0 : index
    %c0_11 = arith.constant 0 : index
    %19 = vector.load %arg3[%c0_8, %c0_9, %c0_10, %c0_11] : memref<1x2x3x256xf32, #tpu.memory_space<vmem>>, vector<1x1x3x256xf32>
    %20 = vector.shape_cast %19 : vector<1x1x3x256xf32> to vector<3x256xf32>
    %21 = vector.shape_cast %18 : vector<3x256xf32> to vector<1x1x3x256xf32>
    tpu.vector_store %arg3[%c0_8, %c0_9, %c0_10, %c0_11], %21 {strides = array<i32>} : memref<1x2x3x256xf32, #tpu.memory_space<vmem>>, vector<1x1x3x256xf32>,
    %c1 = arith.constant 1 : index
    %c0_12 = arith.constant 0 : index
    %c0_13 = arith.constant 0 : index
    %22 = vector.load %arg1[%c1, %c0_12, %c0_13] : memref<2x8x256xf32, #tpu.memory_space<vmem>>, vector<1x8x256xf32>
    %23 = vector.shape_cast %22 : vector<1x8x256xf32> to vector<8x256xf32>
    %24 = arith.mulf %23, %23 : vector<8x256xf32>
    %cst_14 = arith.constant dense<0.000000e+00> : vector<8xf32>
    %25 = vector.multi_reduction <add>, %24, %cst_14 [1] : vector<8x256xf32> to vector<8xf32>
    %26 = vector.shape_cast %25 : vector<8xf32> to vector<8x1xf32>
    %cst_15 = arith.constant 0.000000e+00 : f32
    %27 = vector.broadcast %cst_15 : f32 to vector<8x1xf32>
    %28 = arith.cmpf ogt, %26, %27 : vector<8x1xf32>
    %29 = math.rsqrt %26 : vector<8x1xf32>
    %cst_16 = arith.constant 0.000000e+00 : f32
    %30 = vector.broadcast %cst_16 : f32 to vector<8x1xf32>
    %31 = arith.select %28, %29, %30 : vector<8x1xi1>, vector<8x1xf32>
    %32 = vector.broadcast %31 : vector<8x1xf32> to vector<8x256xf32>
    %33 = arith.mulf %23, %32 : vector<8x256xf32>
    %cst_17 = arith.constant dense<0.000000e+00> : vector<24x256xf32>
    %34 = tpu.matmul %0, %33, %cst_17 {dimension_numbers = #tpu.dot_dimension_numbers<[1], [0], [0], [1], [0, 0, 1, 1], [], []>} : vector<24x8xf32>, vector<8x256xf32>, vector<24x256xf32> -> vector<24x256xf32>
    %35 = vector.shape_cast %34 : vector<24x256xf32> to vector<3x8x256xf32>
    %36 = vector.shape_cast %33 : vector<8x256xf32> to vector<1x8x256xf32>
    %37 = vector.broadcast %36 : vector<1x8x256xf32> to vector<3x8x256xf32>
    %38 = arith.mulf %35, %37 : vector<3x8x256xf32>
    %cst_18 = arith.constant dense<0.000000e+00> : vector<3x256xf32>
    %39 = vector.multi_reduction <add>, %38, %cst_18 [1] : vector<3x8x256xf32> to vector<3x256xf32>
    %c0_19 = arith.constant 0 : index
    %c1_20 = arith.constant 1 : index
    %c0_21 = arith.constant 0 : index
    %c0_22 = arith.constant 0 : index
    %40 = vector.load %arg3[%c0_19, %c1_20, %c0_21, %c0_22] : memref<1x2x3x256xf32, #tpu.memory_space<vmem>>, vector<1x1x3x256xf32>
    %41 = vector.shape_cast %40 : vector<1x1x3x256xf32> to vector<3x256xf32>
    %42 = vector.shape_cast %39 : vector<3x256xf32> to vector<1x1x3x256xf32>
    tpu.vector_store %arg3[%c0_19, %c1_20, %c0_21, %c0_22], %42 {strides = array<i32>} : memref<1x2x3x256xf32, #tpu.memory_space<vmem>>, vector<1x1x3x256xf32>,
    return
  }
  func.func @transform_0(%arg0: i32) -> (i32, i32, i32) {
    %c0_i32 = arith.constant 0 : i32
    %c0_i32_0 = arith.constant 0 : i32
    %c0_i32_1 = arith.constant 0 : i32
    return %arg0, %c0_i32, %c0_i32_0 : i32, i32, i32
  }
  func.func @transform_1(%arg0: i32) -> (i32, i32) {
    %c0_i32 = arith.constant 0 : i32
    %c0_i32_0 = arith.constant 0 : i32
    %c0_i32_1 = arith.constant 0 : i32
    return %c0_i32, %c0_i32_0 : i32, i32
  }
  func.func @transform_2(%arg0: i32) -> (i32, i32, i32, i32) {
    %c0_i32 = arith.constant 0 : i32
    %c0_i32_0 = arith.constant 0 : i32
    %c0_i32_1 = arith.constant 0 : i32
    %c0_i32_2 = arith.constant 0 : i32
    return %arg0, %c0_i32, %c0_i32_0, %c0_i32_1 : i32, i32, i32, i32
  }
}

</mosaic_0001>

<llo_original>
// kernel: tpu_custom_call.1
$region0: #{tpu_custom_call.1}
  #allocation0 [shape = 'u32[]', space=smem, size = 0x4, offset = 0x4, fixed_abs, tag = 'smem constant byte address 0x4 - core index']
  #allocation1 [shape = 'u32[144,128]{1,0:T(1,128)}', space=vmem, size = 0x12000, scoped, tag = 'internal scratch']
  %s0 = inlined_call_operand.vmem [shape: f32[2,8,256], index: 0, kind: input, shape index: {}]
  %s1 = inlined_call_operand.vmem [shape: f32[24,8], index: 1, kind: input, shape index: {}]
  %s2 = inlined_call_operand.vmem [shape: f32[1,2,3,256], index: 2, kind: output, shape index: {}]
  %s3 = sld [smem:[#allocation0]]
  $region18: #{tpu_custom_call.1} parent=0
    _
  %s5 = ssub.s32 1, %s3
  %s6 = scalar_select 0, %s5, %s3
  // Predicated region
  $region2: #{tpu_custom_call.1} parent=0 // pred_check
    _
  $region3: #{tpu_custom_call.1} parent=0 // pred_check_branch
    %8 = sbr.rel (0) target = $region5
  $region4: #{tpu_custom_call.1} parent=0 // pred_region
    _
  $region5: #{tpu_custom_call.1} parent=0 // pred_fallthru
    _
  // Predicated region
  $region6: #{tpu_custom_call.1} parent=0 // pred_check
    _
  $region7: #{tpu_custom_call.1} parent=0 // pred_check_branch
    %10 = sbr.rel (0) target = $region9
  $region8: #{tpu_custom_call.1} parent=0 // pred_region
    _
  $region9: #{tpu_custom_call.1} parent=0 // pred_fallthru
    _
  %v11 = vld [vmem:[%s1] sm:$0xff]
  %v12 = vld [vmem:[%s1 + $0x8] sm:$0xff]
  %v13 = vld [vmem:[%s1 + $0x10] sm:$0xff]
  %v14 = vld [vmem:[%s0] sm:$0xff]
  %v15 = vld [vmem:[%s0 + $0x8] sm:$0xff]
  %v16 = vmul.f32 %v14, %v14
  %v17 = vmul.f32 %v15, %v15
  %v18 = vadd.f32 %v16, %v17
  %19 = vadd.xlane.f32.xlu0 %v18
  %v20 = vpop.xlane.xlu0 %19
  %vm21 = vcmp.gt.f32.partialorder %v20, 0.0
  %v22 = vrsqrt.pop %v20
  %v23 = vsel %vm21, %v22, 0.0
  %v24 = vmul.f32 %v14, %v23
  %v25 = vmul.f32 %v15, %v23
  %vm26 = vcmask 64512
  %v28 = vsel %vm26, %v11, 0
  %v31 = vsel %vm26, %v12, 0
  %v34 = vsel %vm26, %v13, 0
  %36 = vmatprep.subr.mxu0 %v25
  %37 = vmatpush1.msra.mxu0 %v24
  %38 = vmatprep.subr.mxu0 0.0
  %39 = vmatpush1.msra.mxu0 0.0
  %40 = vmatprep.subr.mxu0 0.0
  %41 = vmatpush1.msra.mxu0 0.0
  %42 = vmatprep.subr.mxu0 0.0
  %43 = vmatpush1.msra.mxu0 0.0
  %44 = vmatprep.subr.mxu0 0.0
  %45 = vmatpush1.msra.mxu0 0.0
  %46 = vmatprep.subr.mxu0 0.0
  %47 = vmatpush1.msra.mxu0 0.0
  %48 = vmatprep.subr.mxu0 0.0
  %49 = vmatpush1.msra.mxu0 0.0
  %50 = vmatprep.subr.mxu0 0.0
  %51 = vmatpush1.msra.mxu0 0.0
  %52 = vmatprep.subr.mxu0 0.0
  %53 = vmatpush1.msra.mxu0 0.0
  %54 = vmatprep.subr.mxu0 0.0
  %55 = vmatpush1.msra.mxu0 0.0
  %56 = vmatprep.subr.mxu0 0.0
  %57 = vmatpush1.msra.mxu0 0.0
  %58 = vmatprep.subr.mxu0 0.0
  %59 = vmatpush1.msra.mxu0 0.0
  %60 = vmatprep.subr.mxu0 0.0
  %61 = vmatpush1.msra.mxu0 0.0
  %62 = vmatprep.subr.mxu0 0.0
  %63 = vmatpush1.msra.mxu0 0.0
  %64 = vmatprep.subr.mxu0 0.0
  %65 = vmatpush1.msra.mxu0 0.0
  %66 = vmatprep.subr.mxu0 0.0
  %67 = vmatpush1.msra.mxu0 0.0
  %68 = vmatprep.subr.mxu0 0.0
  %69 = vmatpush1.msra.mxu0 0.0
  %70 = vmatprep.subr.mxu0 0.0
  %71 = vmatpush1.msra.mxu0 0.0
  %72 = vmatprep.subr.mxu0 0.0
  %73 = vmatpush1.msra.mxu0 0.0
  %74 = vmatprep.subr.mxu0 0.0
  %75 = vmatpush1.msra.mxu0 0.0
  %76 = vmatprep.subr.mxu0 0.0
  %77 = vmatpush1.msra.mxu0 0.0
  %78 = vmatprep.subr.mxu0 0.0
  %79 = vmatpush1.msra.mxu0 0.0
  %80 = vmatprep.subr.mxu0 0.0
  %81 = vmatpush1.msra.mxu0 0.0
  %82 = vmatprep.subr.mxu0 0.0
  %83 = vmatpush1.msra.mxu0 0.0
  %84 = vmatprep.subr.mxu0 0.0
  %85 = vmatpush1.msra.mxu0 0.0
  %86 = vmatprep.subr.mxu0 0.0
  %87 = vmatpush1.msra.mxu0 0.0
  %88 = vmatprep.subr.mxu0 0.0
  %89 = vmatpush1.msra.mxu0 0.0
  %90 = vmatprep.subr.mxu0 0.0
  %91 = vmatpush1.msra.mxu0 0.0
  %92 = vmatprep.subr.mxu0 0.0
  %93 = vmatpush1.msra.mxu0 0.0
  %94 = vmatprep.subr.mxu0 0.0
  %95 = vmatpush1.msra.mxu0 0.0
  %96 = vmatprep.subr.mxu0 0.0
  %97 = vmatpush1.msra.mxu0 0.0
  %98 = vmatprep.subr.mxu0 0.0
  %99 = vmatpush1.msra.mxu0 0.0
  %100 = vmatprep.mubr.f32.mxu0 0.0
  %101 = vmatmul.mubr.f32.gmra.mrb[0].mxu0 %v28
  %v102 = vpop.f32.mrb[0].mxu0
  %v103 = vadd.f32 0.0, %v102
  %v104 = vpop.f32.mrb[0].mxu0
  %v105 = vadd.f32 0.0, %v104
  %106 = vmatprep.mubr.f32.mxu0 0.0
  %107 = vmatmul.mubr.f32.gmra.mrb[0].mxu0 %v31
  %v108 = vpop.f32.mrb[0].mxu0
  %v109 = vadd.f32 0.0, %v108
  %v110 = vpop.f32.mrb[0].mxu0
  %v111 = vadd.f32 0.0, %v110
  %112 = vmatprep.mubr.f32.mxu0 0.0
  %113 = vmatmul.mubr.f32.gmra.mrb[0].mxu0 %v34
  %v114 = vpop.f32.mrb[0].mxu0
  %v115 = vadd.f32 0.0, %v114
  %v116 = vpop.f32.mrb[0].mxu0
  %v117 = vadd.f32 0.0, %v116
  %118 = vdwg.mxu0
  %v119 = vmul.f32 %v103, %v24
  %v120 = vmul.f32 %v105, %v25
  %v121 = vmul.f32 %v109, %v24
  %v122 = vmul.f32 %v111, %v25
  %v123 = vmul.f32 %v115, %v24
  %v124 = vmul.f32 %v117, %v25
  %v125 = vrot.slane %v119, 4
  %v126 = vadd.f32 %v119, %v125
  %v127 = vrot.slane %v126, 2
  %v128 = vadd.f32 %v126, %v127
  %v129 = vrot.slane %v128, 1
  %v130 = vadd.f32 %v128, %v129
  %v131 = vrot.slane %v120, 4
  %v132 = vadd.f32 %v120, %v131
  %v133 = vrot.slane %v132, 2
  %v134 = vadd.f32 %v132, %v133
  %v135 = vrot.slane %v134, 1
  %v136 = vadd.f32 %v134, %v135
  %v137 = vrot.slane %v121, 4
  %v138 = vadd.f32 %v121, %v137
  %v139 = vrot.slane %v138, 2
  %v140 = vadd.f32 %v138, %v139
  %v141 = vrot.slane %v140, 1
  %v142 = vadd.f32 %v140, %v141
  %v143 = vrot.slane %v122, 4
  %v144 = vadd.f32 %v122, %v143
  %v145 = vrot.slane %v144, 2
  %v146 = vadd.f32 %v144, %v145
  %v147 = vrot.slane %v146, 1
  %v148 = vadd.f32 %v146, %v147
  %v149 = vrot.slane %v123, 4
  %v150 = vadd.f32 %v123, %v149
  %v151 = vrot.slane %v150, 2
  %v152 = vadd.f32 %v150, %v151
  %v153 = vrot.slane %v152, 1
  %v154 = vadd.f32 %v152, %v153
  %v155 = vrot.slane %v124, 4
  %v156 = vadd.f32 %v124, %v155
  %v157 = vrot.slane %v156, 2
  %v158 = vadd.f32 %v156, %v157
  %v159 = vrot.slane %v158, 1
  %v160 = vadd.f32 %v158, %v159
  %v167 = vcombine.low %v130, %v136
  %v168 = vcombine.low %v142, %v148
  %v169 = vcombine.low %v154, %v160
  %v170 = vrot.slane %v168, 7
  %vm171 = vcmask 1041409
  %v172 = vsel %vm171, %v170, %v167
  %vm173 = vcmask 1045509
  %v174 = vsel %vm173, %v170, %v172
  %v175 = vrot.slane %v169, 6
  %vm176 = vcmask 1042434
  %v177 = vsel %vm176, %v175, %v174
  %vm178 = vcmask 1046534
  %v179 = vsel %vm178, %v175, %v177
  %181 = vst [vmem:[%s2] sm:$0x77] %v179
  %s182 = scalar_lea.vmem %s0, 16
  %v183 = vld [vmem:[%s182] sm:$0xff]
  %v184 = vld [vmem:[%s182 + $0x8] sm:$0xff]
  %v185 = vmul.f32 %v183, %v183
  %v186 = vmul.f32 %v184, %v184
  %v187 = vadd.f32 %v185, %v186
  %188 = vadd.xlane.f32.xlu0 %v187
  %v189 = vpop.xlane.xlu0 %188
  %vm190 = vcmp.gt.f32.partialorder %v189, 0.0
  %v191 = vrsqrt.pop %v189
  %v192 = vsel %vm190, %v191, 0.0
  %v193 = vmul.f32 %v183, %v192
  %v194 = vmul.f32 %v184, %v192
  %195 = vmatprep.subr.mxu0 %v194
  %196 = vmatpush1.msra.mxu0 %v193
  %197 = vmatprep.subr.mxu0 0.0
  %198 = vmatpush1.msra.mxu0 0.0
  %199 = vmatprep.subr.mxu0 0.0
  %200 = vmatpush1.msra.mxu0 0.0
  %201 = vmatprep.subr.mxu0 0.0
  %202 = vmatpush1.msra.mxu0 0.0
  %203 = vmatprep.subr.mxu0 0.0
  %204 = vmatpush1.msra.mxu0 0.0
  %205 = vmatprep.subr.mxu0 0.0
  %206 = vmatpush1.msra.mxu0 0.0
  %207 = vmatprep.subr.mxu0 0.0
  %208 = vmatpush1.msra.mxu0 0.0
  %209 = vmatprep.subr.mxu0 0.0
  %210 = vmatpush1.msra.mxu0 0.0
  %211 = vmatprep.subr.mxu0 0.0
  %212 = vmatpush1.msra.mxu0 0.0
  %213 = vmatprep.subr.mxu0 0.0
  %214 = vmatpush1.msra.mxu0 0.0
  %215 = vmatprep.subr.mxu0 0.0
  %216 = vmatpush1.msra.mxu0 0.0
  %217 = vmatprep.subr.mxu0 0.0
  %218 = vmatpush1.msra.mxu0 0.0
  %219 = vmatprep.subr.mxu0 0.0
  %220 = vmatpush1.msra.mxu0 0.0
  %221 = vmatprep.subr.mxu0 0.0
  %222 = vmatpush1.msra.mxu0 0.0
  %223 = vmatprep.subr.mxu0 0.0
  %224 = vmatpush1.msra.mxu0 0.0
  %225 = vmatprep.subr.mxu0 0.0
  %226 = vmatpush1.msra.mxu0 0.0
  %227 = vmatprep.subr.mxu0 0.0
  %228 = vmatpush1.msra.mxu0 0.0
  %229 = vmatprep.subr.mxu0 0.0
  %230 = vmatpush1.msra.mxu0 0.0
  %231 = vmatprep.subr.mxu0 0.0
  %232 = vmatpush1.msra.mxu0 0.0
  %233 = vmatprep.subr.mxu0 0.0
  %234 = vmatpush1.msra.mxu0 0.0
  %235 = vmatprep.subr.mxu0 0.0
  %236 = vmatpush1.msra.mxu0 0.0
  %237 = vmatprep.subr.mxu0 0.0
  %238 = vmatpush1.msra.mxu0 0.0
  %239 = vmatprep.subr.mxu0 0.0
  %240 = vmatpush1.msra.mxu0 0.0
  %241 = vmatprep.subr.mxu0 0.0
  %242 = vmatpush1.msra.mxu0 0.0
  %243 = vmatprep.subr.mxu0 0.0
  %244 = vmatpush1.msra.mxu0 0.0
  %245 = vmatprep.subr.mxu0 0.0
  %246 = vmatpush1.msra.mxu0 0.0
  %247 = vmatprep.subr.mxu0 0.0
  %248 = vmatpush1.msra.mxu0 0.0
  %249 = vmatprep.subr.mxu0 0.0
  %250 = vmatpush1.msra.mxu0 0.0
  %251 = vmatprep.subr.mxu0 0.0
  %252 = vmatpush1.msra.mxu0 0.0
  %253 = vmatprep.subr.mxu0 0.0
  %254 = vmatpush1.msra.mxu0 0.0
  %255 = vmatprep.subr.mxu0 0.0
  %256 = vmatpush1.msra.mxu0 0.0
  %257 = vmatprep.subr.mxu0 0.0
  %258 = vmatpush1.msra.mxu0 0.0
  %259 = vmatprep.mubr.f32.mxu0 0.0
  %260 = vmatmul.mubr.f32.gmra.mrb[0].mxu0 %v28
  %v261 = vpop.f32.mrb[0].mxu0
  %v262 = vadd.f32 0.0, %v261
  %v263 = vpop.f32.mrb[0].mxu0
  %v264 = vadd.f32 0.0, %v263
  %265 = vmatprep.mubr.f32.mxu0 0.0
  %266 = vmatmul.mubr.f32.gmra.mrb[0].mxu0 %v31
  %v267 = vpop.f32.mrb[0].mxu0
  %v268 = vadd.f32 0.0, %v267
  %v269 = vpop.f32.mrb[0].mxu0
  %v270 = vadd.f32 0.0, %v269
  %271 = vmatprep.mubr.f32.mxu0 0.0
  %272 = vmatmul.mubr.f32.gmra.mrb[0].mxu0 %v34
  %v273 = vpop.f32.mrb[0].mxu0
  %v274 = vadd.f32 0.0, %v273
  %v275 = vpop.f32.mrb[0].mxu0
  %v276 = vadd.f32 0.0, %v275
  %277 = vdwg.mxu0
  %v278 = vmul.f32 %v262, %v193
  %v279 = vmul.f32 %v264, %v194
  %v280 = vmul.f32 %v268, %v193
  %v281 = vmul.f32 %v270, %v194
  %v282 = vmul.f32 %v274, %v193
  %v283 = vmul.f32 %v276, %v194
  %v284 = vrot.slane %v278, 4
  %v285 = vadd.f32 %v278, %v284
  %v286 = vrot.slane %v285, 2
  %v287 = vadd.f32 %v285, %v286
  %v288 = vrot.slane %v287, 1
  %v289 = vadd.f32 %v287, %v288
  %v290 = vrot.slane %v279, 4
  %v291 = vadd.f32 %v279, %v290
  %v292 = vrot.slane %v291, 2
  %v293 = vadd.f32 %v291, %v292
  %v294 = vrot.slane %v293, 1
  %v295 = vadd.f32 %v293, %v294
  %v296 = vrot.slane %v280, 4
  %v297 = vadd.f32 %v280, %v296
  %v298 = vrot.slane %v297, 2
  %v299 = vadd.f32 %v297, %v298
  %v300 = vrot.slane %v299, 1
  %v301 = vadd.f32 %v299, %v300
  %v302 = vrot.slane %v281, 4
  %v303 = vadd.f32 %v281, %v302
  %v304 = vrot.slane %v303, 2
  %v305 = vadd.f32 %v303, %v304
  %v306 = vrot.slane %v305, 1
  %v307 = vadd.f32 %v305, %v306
  %v308 = vrot.slane %v282, 4
  %v309 = vadd.f32 %v282, %v308
  %v310 = vrot.slane %v309, 2
  %v311 = vadd.f32 %v309, %v310
  %v312 = vrot.slane %v311, 1
  %v313 = vadd.f32 %v311, %v312
  %v314 = vrot.slane %v283, 4
  %v315 = vadd.f32 %v283, %v314
  %v316 = vrot.slane %v315, 2
  %v317 = vadd.f32 %v315, %v316
  %v318 = vrot.slane %v317, 1
  %v319 = vadd.f32 %v317, %v318
  %v326 = vcombine.low %v289, %v295
  %v327 = vcombine.low %v301, %v307
  %v328 = vcombine.low %v313, %v319
  %v329 = vrot.slane %v327, 7
  %v330 = vsel %vm171, %v329, %v326
  %v331 = vsel %vm173, %v329, %v330
  %v332 = vrot.slane %v328, 6
  %v333 = vsel %vm176, %v332, %v331
  %v334 = vsel %vm178, %v332, %v333
  %s336 = scalar_lea.vmem %s2, 8
  %337 = vst [vmem:[%s336] sm:$0x77] %v334
  // Predicated region
  $region10: #{tpu_custom_call.1} parent=0 // pred_check
    _
  $region11: #{tpu_custom_call.1} parent=0 // pred_check_branch
    %339 = sbr.rel (0) target = $region13
  $region12: #{tpu_custom_call.1} parent=0 // pred_region
    _
  $region13: #{tpu_custom_call.1} parent=0 // pred_fallthru
    _
  // Predicated region
  $region14: #{tpu_custom_call.1} parent=0 // pred_check
    _
  $region15: #{tpu_custom_call.1} parent=0 // pred_check_branch
    %341 = sbr.rel (0) target = $region17
  $region16: #{tpu_custom_call.1} parent=0 // pred_region
    _
  $region17: #{tpu_custom_call.1} parent=0 // pred_fallthru
    _

</llo_original>
